<compile_context>
chip_gen: v7x
topology: tpu7x:2x2x1
jax: 0.10.0
libtpu: 0.0.40
codegen_flags: <defaults>
</compile_context>

<pallas_src>
import functools

import jax
import jax.numpy as jnp
from jax.experimental import pallas as pl
from jax.experimental.pallas import tpu as pltpu

NEG_SLOPE = 0.01  # PyTorch nn.LeakyReLU default
K_IN = 58         # raw input features
K_PAD = 64        # layer-1 K padded for clean (8,128)-friendly loads
N_OUT = 8         # raw output features
N_PAD = 128       # final N padded so the output store is lane-dense
H1, H2, H3 = 256, 128, 64


def _leaky_relu_f32(v):
    return jnp.where(v > 0, v, NEG_SLOPE * v)


def mlp_kernel(x_ref,
               w1_ref, b1_ref,
               w2_ref, b2_ref,
               w3_ref, b3_ref,
               w4_ref, b4_ref,
               o_ref):
    """One batch tile: 4 MXU matmuls, f32 accumulate, f32 bias+LeakyReLU."""
    cdt = w1_ref.dtype  # matmul operand dtype (bf16 fast path or f32)

    h = jnp.dot(x_ref[...], w1_ref[...],
                preferred_element_type=jnp.float32) + b1_ref[...]
    h = _leaky_relu_f32(h)
    # Dropout(0.2) -> identity in eval mode.

    h = jnp.dot(h.astype(cdt), w2_ref[...],
                preferred_element_type=jnp.float32) + b2_ref[...]
    h = _leaky_relu_f32(h)

    h = jnp.dot(h.astype(cdt), w3_ref[...],
                preferred_element_type=jnp.float32) + b3_ref[...]
    h = _leaky_relu_f32(h)

    h = jnp.dot(h.astype(cdt), w4_ref[...],
                preferred_element_type=jnp.float32) + b4_ref[...]
    h = _leaky_relu_f32(h)

    o_ref[...] = h.astype(o_ref.dtype)


def _round_up(x, m):
    return (x + m - 1) // m * m


@functools.partial(jax.jit, static_argnames=("tb", "compute_dtype"))
def nn_demand_forward(x, params, *, tb=256, compute_dtype=jnp.bfloat16):
    """x: [B, 58] f32.  params: [(W,b)]*4 with W:[in,out] f32, b:[1,out] f32.
    Returns [B, 8] f32."""
    (w1, b1), (w2, b2), (w3, b3), (w4, b4) = params
    B, K = x.shape
    assert K == K_IN, K

    # Batch tile: big enough to amortize per-step overhead / fill the MXU M dim,
    # but don't pad a tiny batch all the way up to `tb`.
    tb = max(8, min(tb, _round_up(B, 8)))
    b_pad = _round_up(B, tb)

    # Pad + cast matmul operands; biases stay f32 for the f32 epilogue math.
    x_p = jnp.pad(x, ((0, b_pad - B), (0, K_PAD - K))).astype(compute_dtype)
    w1_p = jnp.pad(w1, ((0, K_PAD - K), (0, 0))).astype(compute_dtype)
    w2_c = w2.astype(compute_dtype)
    w3_c = w3.astype(compute_dtype)
    w4_p = jnp.pad(w4, ((0, 0), (0, N_PAD - N_OUT))).astype(compute_dtype)
    b4_p = jnp.pad(b4, ((0, 0), (0, N_PAD - N_OUT)))  # f32

    grid = (b_pad // tb,)

    def _const(shape):
        # Block index never changes -> Pallas keeps this operand resident.
        return pl.BlockSpec(shape, lambda i: (0, 0))

    in_specs = [
        pl.BlockSpec((tb, K_PAD), lambda i: (i, 0)),   # x tile (pipelined)
        _const((K_PAD, H1)), _const((1, H1)),
        _const((H1, H2)),    _const((1, H2)),
        _const((H2, H3)),    _const((1, H3)),
        _const((H3, N_PAD)), _const((1, N_PAD)),
    ]
    out_specs = pl.BlockSpec((tb, N_PAD), lambda i: (i, 0))

    flops = 2 * b_pad * (K_PAD * H1 + H1 * H2 + H2 * H3 + H3 * N_PAD)
    w_bytes = sum(int(a.size) * a.dtype.itemsize
                  for a in (w1_p, w2_c, w3_c, w4_p, b1, b2, b3, b4_p))
    bytes_accessed = (int(x_p.size) * x_p.dtype.itemsize
                      + b_pad * N_PAD * 4 + w_bytes)

    out_padded = pl.pallas_call(
        mlp_kernel,
        grid=grid,
        in_specs=in_specs,
        out_specs=out_specs,
        out_shape=jax.ShapeDtypeStruct((b_pad, N_PAD), jnp.float32),
        compiler_params=pltpu.CompilerParams(
            dimension_semantics=("parallel",)),   # v7x: shard batch over 2 TCs
        cost_estimate=pl.CostEstimate(
            flops=flops, transcendentals=0, bytes_accessed=bytes_accessed),
    )(x_p, w1_p, b1, w2_c, b2, w3_c, b3, w4_p, b4_p)

    return out_padded[:B, :N_OUT]


def init_params(key):
    """Deterministic init mimicking nn.Linear default (uniform +-1/sqrt(fan_in))."""
    dims = [(K_IN, H1), (H1, H2), (H2, H3), (H3, N_OUT)]
    params = []
    for fan_in, fan_out in dims:
        key, kw, kb = jax.random.split(key, 3)
        bound = 1.0 / jnp.sqrt(fan_in)
        w = jax.random.uniform(kw, (fan_in, fan_out), jnp.float32, -bound, bound)
        b = jax.random.uniform(kb, (1, fan_out), jnp.float32, -bound, bound)
        params.append((w, b))
    return params


def reference_forward(x, params):
    h = x
    for w, b in params:
        h = h @ w + b
        h = jnp.where(h > 0, h, NEG_SLOPE * h)
    return h


if __name__ == "__main__":
    key = jax.random.PRNGKey(0)
    kx, kp = jax.random.split(key)

    B = 8
    x = jax.random.normal(kx, (B, K_IN), dtype=jnp.float32)
    params = init_params(kp)

    ref = reference_forward(x, params)

    # Strict correctness check: f32 compute path.
    out_f32 = jax.block_until_ready(
        nn_demand_forward(x, params, tb=256, compute_dtype=jnp.float32))
    assert out_f32.shape == (B, N_OUT), out_f32.shape
    assert jnp.allclose(out_f32, ref, atol=1e-5, rtol=1e-5), "f32 mismatch vs reference"

    # Fast path: bf16 MXU operands, f32 accumulation/epilogue.
    out_bf16 = jax.block_until_ready(
        nn_demand_forward(x, params, tb=256, compute_dtype=jnp.bfloat16))
    assert out_bf16.shape == (B, N_OUT), out_bf16.shape
    assert jnp.allclose(out_bf16, ref, atol=5e-2, rtol=5e-2), "bf16 mismatch vs reference"

    print("KERNEL_OK")
</pallas_src>

<mosaic_0001>
module attributes {stable_mosaic.version = 11 : i64} {
  func.func @mlp_kernel(%arg0: i32, %arg1: memref<8x64xf32, #tpu.memory_space<vmem>>, %arg2: memref<64x256xf32, #tpu.memory_space<vmem>>, %arg3: memref<1x256xf32, #tpu.memory_space<vmem>>, %arg4: memref<256x128xf32, #tpu.memory_space<vmem>>, %arg5: memref<1x128xf32, #tpu.memory_space<vmem>>, %arg6: memref<128x64xf32, #tpu.memory_space<vmem>>, %arg7: memref<1x64xf32, #tpu.memory_space<vmem>>, %arg8: memref<64x128xf32, #tpu.memory_space<vmem>>, %arg9: memref<1x128xf32, #tpu.memory_space<vmem>>, %arg10: memref<8x128xf32, #tpu.memory_space<vmem>>) attributes {dimension_semantics = [#tpu.dimension_semantics<parallel>], iteration_bounds = array<i64: 1>, scalar_prefetch = 0 : i64, scratch_operands = 0 : i64, tpu.core_type = #tpu.core_type<tc>, window_params = [{transform_indices = @transform_0, window_bounds = array<i64: 8, 64>}, {pipeline_mode = #tpu.pipeline_mode<synchronous>, transform_indices = @transform_1, window_bounds = array<i64: 64, 256>}, {pipeline_mode = #tpu.pipeline_mode<synchronous>, transform_indices = @transform_2, window_bounds = array<i64: 1, 256>}, {pipeline_mode = #tpu.pipeline_mode<synchronous>, transform_indices = @transform_3, window_bounds = array<i64: 256, 128>}, {pipeline_mode = #tpu.pipeline_mode<synchronous>, transform_indices = @transform_4, window_bounds = array<i64: 1, 128>}, {pipeline_mode = #tpu.pipeline_mode<synchronous>, transform_indices = @transform_5, window_bounds = array<i64: 128, 64>}, {pipeline_mode = #tpu.pipeline_mode<synchronous>, transform_indices = @transform_6, window_bounds = array<i64: 1, 64>}, {pipeline_mode = #tpu.pipeline_mode<synchronous>, transform_indices = @transform_7, window_bounds = array<i64: 64, 128>}, {pipeline_mode = #tpu.pipeline_mode<synchronous>, transform_indices = @transform_8, window_bounds = array<i64: 1, 128>}, {transform_indices = @transform_9, window_bounds = array<i64: 8, 128>}]} {
    %c0 = arith.constant 0 : index
    %c0_0 = arith.constant 0 : index
    %0 = vector.load %arg1[%c0, %c0_0] : memref<8x64xf32, #tpu.memory_space<vmem>>, vector<8x64xf32>
    %c0_1 = arith.constant 0 : index
    %c0_2 = arith.constant 0 : index
    %1 = vector.load %arg2[%c0_1, %c0_2] : memref<64x256xf32, #tpu.memory_space<vmem>>, vector<64x256xf32>
    %cst = arith.constant dense<0.000000e+00> : vector<8x256xf32>
    %2 = tpu.matmul %0, %1, %cst {dimension_numbers = #tpu.dot_dimension_numbers<[1], [0], [0], [1], [0, 0, 1, 1], [], []>} : vector<8x64xf32>, vector<64x256xf32>, vector<8x256xf32> -> vector<8x256xf32>
    %c0_3 = arith.constant 0 : index
    %c0_4 = arith.constant 0 : index
    %3 = vector.load %arg3[%c0_3, %c0_4] : memref<1x256xf32, #tpu.memory_space<vmem>>, vector<1x256xf32>
    %4 = vector.broadcast %3 : vector<1x256xf32> to vector<8x256xf32>
    %5 = arith.addf %2, %4 : vector<8x256xf32>
    %cst_5 = arith.constant 0.000000e+00 : f32
    %6 = vector.broadcast %cst_5 : f32 to vector<8x256xf32>
    %7 = arith.cmpf ogt, %5, %6 : vector<8x256xf32>
    %cst_6 = arith.constant 0.00999999977 : f32
    %8 = vector.broadcast %cst_6 : f32 to vector<8x256xf32>
    %9 = arith.mulf %8, %5 : vector<8x256xf32>
    %10 = arith.select %7, %5, %9 : vector<8x256xi1>, vector<8x256xf32>
    %c0_7 = arith.constant 0 : index
    %c0_8 = arith.constant 0 : index
    %11 = vector.load %arg4[%c0_7, %c0_8] : memref<256x128xf32, #tpu.memory_space<vmem>>, vector<256x128xf32>
    %cst_9 = arith.constant dense<0.000000e+00> : vector<8x128xf32>
    %12 = tpu.matmul %10, %11, %cst_9 {dimension_numbers = #tpu.dot_dimension_numbers<[1], [0], [0], [1], [0, 0, 1, 1], [], []>} : vector<8x256xf32>, vector<256x128xf32>, vector<8x128xf32> -> vector<8x128xf32>
    %c0_10 = arith.constant 0 : index
    %c0_11 = arith.constant 0 : index
    %13 = vector.load %arg5[%c0_10, %c0_11] : memref<1x128xf32, #tpu.memory_space<vmem>>, vector<1x128xf32>
    %14 = vector.broadcast %13 : vector<1x128xf32> to vector<8x128xf32>
    %15 = arith.addf %12, %14 : vector<8x128xf32>
    %cst_12 = arith.constant 0.000000e+00 : f32
    %16 = vector.broadcast %cst_12 : f32 to vector<8x128xf32>
    %17 = arith.cmpf ogt, %15, %16 : vector<8x128xf32>
    %cst_13 = arith.constant 0.00999999977 : f32
    %18 = vector.broadcast %cst_13 : f32 to vector<8x128xf32>
    %19 = arith.mulf %18, %15 : vector<8x128xf32>
    %20 = arith.select %17, %15, %19 : vector<8x128xi1>, vector<8x128xf32>
    %c0_14 = arith.constant 0 : index
    %c0_15 = arith.constant 0 : index
    %21 = vector.load %arg6[%c0_14, %c0_15] : memref<128x64xf32, #tpu.memory_space<vmem>>, vector<128x64xf32>
    %cst_16 = arith.constant dense<0.000000e+00> : vector<8x64xf32>
    %22 = tpu.matmul %20, %21, %cst_16 {dimension_numbers = #tpu.dot_dimension_numbers<[1], [0], [0], [1], [0, 0, 1, 1], [], []>} : vector<8x128xf32>, vector<128x64xf32>, vector<8x64xf32> -> vector<8x64xf32>
    %c0_17 = arith.constant 0 : index
    %c0_18 = arith.constant 0 : index
    %23 = vector.load %arg7[%c0_17, %c0_18] : memref<1x64xf32, #tpu.memory_space<vmem>>, vector<1x64xf32>
    %24 = vector.broadcast %23 : vector<1x64xf32> to vector<8x64xf32>
    %25 = arith.addf %22, %24 : vector<8x64xf32>
    %cst_19 = arith.constant 0.000000e+00 : f32
    %26 = vector.broadcast %cst_19 : f32 to vector<8x64xf32>
    %27 = arith.cmpf ogt, %25, %26 : vector<8x64xf32>
    %cst_20 = arith.constant 0.00999999977 : f32
    %28 = vector.broadcast %cst_20 : f32 to vector<8x64xf32>
    %29 = arith.mulf %28, %25 : vector<8x64xf32>
    %30 = arith.select %27, %25, %29 : vector<8x64xi1>, vector<8x64xf32>
    %c0_21 = arith.constant 0 : index
    %c0_22 = arith.constant 0 : index
    %31 = vector.load %arg8[%c0_21, %c0_22] : memref<64x128xf32, #tpu.memory_space<vmem>>, vector<64x128xf32>
    %cst_23 = arith.constant dense<0.000000e+00> : vector<8x128xf32>
    %32 = tpu.matmul %30, %31, %cst_23 {dimension_numbers = #tpu.dot_dimension_numbers<[1], [0], [0], [1], [0, 0, 1, 1], [], []>} : vector<8x64xf32>, vector<64x128xf32>, vector<8x128xf32> -> vector<8x128xf32>
    %c0_24 = arith.constant 0 : index
    %c0_25 = arith.constant 0 : index
    %33 = vector.load %arg9[%c0_24, %c0_25] : memref<1x128xf32, #tpu.memory_space<vmem>>, vector<1x128xf32>
    %34 = vector.broadcast %33 : vector<1x128xf32> to vector<8x128xf32>
    %35 = arith.addf %32, %34 : vector<8x128xf32>
    %cst_26 = arith.constant 0.000000e+00 : f32
    %36 = vector.broadcast %cst_26 : f32 to vector<8x128xf32>
    %37 = arith.cmpf ogt, %35, %36 : vector<8x128xf32>
    %cst_27 = arith.constant 0.00999999977 : f32
    %38 = vector.broadcast %cst_27 : f32 to vector<8x128xf32>
    %39 = arith.mulf %38, %35 : vector<8x128xf32>
    %40 = arith.select %37, %35, %39 : vector<8x128xi1>, vector<8x128xf32>
    %c0_28 = arith.constant 0 : index
    %c0_29 = arith.constant 0 : index
    %41 = vector.load %arg10[%c0_28, %c0_29] : memref<8x128xf32, #tpu.memory_space<vmem>>, vector<8x128xf32>
    tpu.vector_store %arg10[%c0_28, %c0_29], %40 {strides = array<i32>} : memref<8x128xf32, #tpu.memory_space<vmem>>, vector<8x128xf32>,
    return
  }
  func.func @transform_0(%arg0: i32) -> (i32, i32) {
    %c0_i32 = arith.constant 0 : i32
    %c0_i32_0 = arith.constant 0 : i32
    return %arg0, %c0_i32 : i32, i32
  }
  func.func @transform_1(%arg0: i32) -> (i32, i32) {
    %c0_i32 = arith.constant 0 : i32
    %c0_i32_0 = arith.constant 0 : i32
    %c0_i32_1 = arith.constant 0 : i32
    return %c0_i32, %c0_i32_0 : i32, i32
  }
  func.func @transform_2(%arg0: i32) -> (i32, i32) {
    %c0_i32 = arith.constant 0 : i32
    %c0_i32_0 = arith.constant 0 : i32
    %c0_i32_1 = arith.constant 0 : i32
    return %c0_i32, %c0_i32_0 : i32, i32
  }
  func.func @transform_3(%arg0: i32) -> (i32, i32) {
    %c0_i32 = arith.constant 0 : i32
    %c0_i32_0 = arith.constant 0 : i32
    %c0_i32_1 = arith.constant 0 : i32
    return %c0_i32, %c0_i32_0 : i32, i32
  }
  func.func @transform_4(%arg0: i32) -> (i32, i32) {
    %c0_i32 = arith.constant 0 : i32
    %c0_i32_0 = arith.constant 0 : i32
    %c0_i32_1 = arith.constant 0 : i32
    return %c0_i32, %c0_i32_0 : i32, i32
  }
  func.func @transform_5(%arg0: i32) -> (i32, i32) {
    %c0_i32 = arith.constant 0 : i32
    %c0_i32_0 = arith.constant 0 : i32
    %c0_i32_1 = arith.constant 0 : i32
    return %c0_i32, %c0_i32_0 : i32, i32
  }
  func.func @transform_6(%arg0: i32) -> (i32, i32) {
    %c0_i32 = arith.constant 0 : i32
    %c0_i32_0 = arith.constant 0 : i32
    %c0_i32_1 = arith.constant 0 : i32
    return %c0_i32, %c0_i32_0 : i32, i32
  }
  func.func @transform_7(%arg0: i32) -> (i32, i32) {
    %c0_i32 = arith.constant 0 : i32
    %c0_i32_0 = arith.constant 0 : i32
    %c0_i32_1 = arith.constant 0 : i32
    return %c0_i32, %c0_i32_0 : i32, i32
  }
  func.func @transform_8(%arg0: i32) -> (i32, i32) {
    %c0_i32 = arith.constant 0 : i32
    %c0_i32_0 = arith.constant 0 : i32
    %c0_i32_1 = arith.constant 0 : i32
    return %c0_i32, %c0_i32_0 : i32, i32
  }
  func.func @transform_9(%arg0: i32) -> (i32, i32) {
    %c0_i32 = arith.constant 0 : i32
    %c0_i32_0 = arith.constant 0 : i32
    return %arg0, %c0_i32 : i32, i32
  }
}

</mosaic_0001>

<llo_original>
// kernel: nn_demand_forward.1
$region0: #{nn_demand_forward.1}
  #allocation0 [shape = 'u32[]', space=smem, size = 0x4, offset = 0x4, fixed_abs, tag = 'smem constant byte address 0x4 - core index']
  #allocation1 [shape = 'u32[144,128]{1,0:T(1,128)}', space=vmem, size = 0x12000, scoped, tag = 'internal scratch']
  %s0 = inlined_call_operand.vmem [shape: f32[8,64], index: 0, kind: input, shape index: {}]
  %s1 = inlined_call_operand.vmem [shape: f32[64,256], index: 1, kind: input, shape index: {}]
  %s2 = inlined_call_operand.vmem [shape: f32[1,256], index: 2, kind: input, shape index: {}]
  %s3 = inlined_call_operand.vmem [shape: f32[256,128], index: 3, kind: input, shape index: {}]
  %s4 = inlined_call_operand.vmem [shape: f32[1,128], index: 4, kind: input, shape index: {}]
  %s5 = inlined_call_operand.vmem [shape: f32[128,64], index: 5, kind: input, shape index: {}]
  %s6 = inlined_call_operand.vmem [shape: f32[1,64], index: 6, kind: input, shape index: {}]
  %s7 = inlined_call_operand.vmem [shape: f32[64,128], index: 7, kind: input, shape index: {}]
  %s8 = inlined_call_operand.vmem [shape: f32[1,128], index: 8, kind: input, shape index: {}]
  %s9 = inlined_call_operand.hbm [shape: f32[8,128], index: 9, kind: output, shape index: {}]
  %s10 = sld [smem:[#allocation0]]
  $region46: #{nn_demand_forward.1} parent=0
    _
  %s12 = ssub.s32 1, %s10
  %s13 = scalar_select 0, %s12, %s10
  $region1: #{nn_demand_forward.1} parent=0
    #allocation2 [shape = 'u8[4096]{0}', space=vmem, size = 0x1000, scoped, tag = 'output window, operand 0, single buffered']
    #allocation3 [shape = 's32[1]{0}', space=sflag, size = 0x4, scoped, tag = 'scoped memory for nn_demand_forward.1']
    %14 = vsyncpa [#allocation3], 0
    // Predicated region
    $region2: #{nn_demand_forward.1} parent=1 // pred_check
      _
    $region3: #{nn_demand_forward.1} parent=1 // pred_check_branch
      %16 = sbr.rel (0) target = $region5
    $region4: #{nn_demand_forward.1} parent=1 // pred_region
      _
    $region5: #{nn_demand_forward.1} parent=1 // pred_fallthru
      _
    // Predicated region
    $region6: #{nn_demand_forward.1} parent=1 // pred_check
      _
    $region7: #{nn_demand_forward.1} parent=1 // pred_check_branch
      %18 = sbr.rel (0) target = $region9
    $region8: #{nn_demand_forward.1} parent=1 // pred_region
      _
    $region9: #{nn_demand_forward.1} parent=1 // pred_fallthru
      _
    // Predicated region
    $region10: #{nn_demand_forward.1} parent=1 // pred_check
      _
    $region11: #{nn_demand_forward.1} parent=1 // pred_check_branch
      %20 = sbr.rel (0) target = $region13
    $region12: #{nn_demand_forward.1} parent=1 // pred_region
      _
    $region13: #{nn_demand_forward.1} parent=1 // pred_fallthru
      _
    // Predicated region
    $region14: #{nn_demand_forward.1} parent=1 // pred_check
      _
    $region15: #{nn_demand_forward.1} parent=1 // pred_check_branch
      %22 = sbr.rel (0) target = $region17
    $region16: #{nn_demand_forward.1} parent=1 // pred_region
      _
    $region17: #{nn_demand_forward.1} parent=1 // pred_fallthru
      _
    // Predicated region
    $region18: #{nn_demand_forward.1} parent=1 // pred_check
      _
    $region19: #{nn_demand_forward.1} parent=1 // pred_check_branch
      %24 = sbr.rel (0) target = $region21
    $region20: #{nn_demand_forward.1} parent=1 // pred_region
      _
    $region21: #{nn_demand_forward.1} parent=1 // pred_fallthru
      _
    // Predicated region
    $region22: #{nn_demand_forward.1} parent=1 // pred_check
      _
    $region23: #{nn_demand_forward.1} parent=1 // pred_check_branch
      %26 = sbr.rel (0) target = $region25
    $region24: #{nn_demand_forward.1} parent=1 // pred_region
      _
    $region25: #{nn_demand_forward.1} parent=1 // pred_fallthru
      _
    // Predicated region
    $region26: #{nn_demand_forward.1} parent=1 // pred_check
      _
    $region27: #{nn_demand_forward.1} parent=1 // pred_check_branch
      %28 = sbr.rel (0) target = $region29
    $region28: #{nn_demand_forward.1} parent=1 // pred_region
      _
    $region29: #{nn_demand_forward.1} parent=1 // pred_fallthru
      _
    // Predicated region
    $region30: #{nn_demand_forward.1} parent=1 // pred_check
      _
    $region31: #{nn_demand_forward.1} parent=1 // pred_check_branch
      %30 = sbr.rel (0) target = $region33
    $region32: #{nn_demand_forward.1} parent=1 // pred_region
      _
    $region33: #{nn_demand_forward.1} parent=1 // pred_fallthru
      _
    // Predicated region
    $region34: #{nn_demand_forward.1} parent=1 // pred_check
      _
    $region35: #{nn_demand_forward.1} parent=1 // pred_check_branch
      %32 = sbr.rel (0) target = $region37
    $region36: #{nn_demand_forward.1} parent=1 // pred_region
      _
    $region37: #{nn_demand_forward.1} parent=1 // pred_fallthru
      _
    %v33 = vld [vmem:[%s0] sm:$0xff]
    %v34 = vld [vmem:[%s1] sm:$0xff]
    %v35 = vld [vmem:[%s1 + $0x8] sm:$0xff]
    %v36 = vld [vmem:[%s1 + $0x10] sm:$0xff]
    %v37 = vld [vmem:[%s1 + $0x18] sm:$0xff]
    %v38 = vld [vmem:[%s1 + $0x20] sm:$0xff]
    %v39 = vld [vmem:[%s1 + $0x28] sm:$0xff]
    %v40 = vld [vmem:[%s1 + $0x30] sm:$0xff]
    %v41 = vld [vmem:[%s1 + $0x38] sm:$0xff]
    %v42 = vld [vmem:[%s1 + $0x40] sm:$0xff]
    %v43 = vld [vmem:[%s1 + $0x48] sm:$0xff]
    %v44 = vld [vmem:[%s1 + $0x50] sm:$0xff]
    %v45 = vld [vmem:[%s1 + $0x58] sm:$0xff]
    %v46 = vld [vmem:[%s1 + $0x60] sm:$0xff]
    %v47 = vld [vmem:[%s1 + $0x68] sm:$0xff]
    %v48 = vld [vmem:[%s1 + $0x70] sm:$0xff]
    %v49 = vld [vmem:[%s1 + $0x78] sm:$0xff]
    %v50 = vld [vmem:[%s2] sm:$0x3]
    %v52 = vlaneseq
    %v53 = vshrl.u32 %v52, 7
    %v54 = vsub.s32 0, %v53
    %v55 = vrot.slane %v50, %v54
    %v56 = vlaneseq
    %v57 = vshrl.u32 %v56, 7
    %v58 = vsub.s32 1, %v57
    %v59 = vrot.slane %v50, %v58
    %vm62 = vcmask 523264
    %v64 = vsel %vm62, %v33, 0
    %66 = vmatprep.subr.mxu0 %v35
    %67 = vmatpush1.msra.mxu0 %v34
    %68 = vmatprep.subr.mxu0 %v37
    %69 = vmatpush1.msra.mxu0 %v36
    %70 = vmatprep.subr.mxu0 %v39
    %71 = vmatpush1.msra.mxu0 %v38
    %72 = vmatprep.subr.mxu0 %v41
    %73 = vmatpush1.msra.mxu0 %v40
    %74 = vmatprep.subr.mxu0 %v43
    %75 = vmatpush1.msra.mxu0 %v42
    %76 = vmatprep.subr.mxu0 %v45
    %77 = vmatpush1.msra.mxu0 %v44
    %78 = vmatprep.subr.mxu0 %v47
    %79 = vmatpush1.msra.mxu0 %v46
    %80 = vmatprep.subr.mxu0 %v49
    %81 = vmatpush1.msra.mxu0 %v48
    %82 = vmatprep.subr.mxu0 0.0
    %83 = vmatpush1.msra.mxu0 0.0
    %84 = vmatprep.subr.mxu0 0.0
    %85 = vmatpush1.msra.mxu0 0.0
    %86 = vmatprep.subr.mxu0 0.0
    %87 = vmatpush1.msra.mxu0 0.0
    %88 = vmatprep.subr.mxu0 0.0
    %89 = vmatpush1.msra.mxu0 0.0
    %90 = vmatprep.subr.mxu0 0.0
    %91 = vmatpush1.msra.mxu0 0.0
    %92 = vmatprep.subr.mxu0 0.0
    %93 = vmatpush1.msra.mxu0 0.0
    %94 = vmatprep.subr.mxu0 0.0
    %95 = vmatpush1.msra.mxu0 0.0
    %96 = vmatprep.subr.mxu0 0.0
    %97 = vmatpush1.msra.mxu0 0.0
    %98 = vmatprep.subr.mxu0 0.0
    %99 = vmatpush1.msra.mxu0 0.0
    %100 = vmatprep.subr.mxu0 0.0
    %101 = vmatpush1.msra.mxu0 0.0
    %102 = vmatprep.subr.mxu0 0.0
    %103 = vmatpush1.msra.mxu0 0.0
    %104 = vmatprep.subr.mxu0 0.0
    %105 = vmatpush1.msra.mxu0 0.0
    %106 = vmatprep.subr.mxu0 0.0
    %107 = vmatpush1.msra.mxu0 0.0
    %108 = vmatprep.subr.mxu0 0.0
    %109 = vmatpush1.msra.mxu0 0.0
    %110 = vmatprep.subr.mxu0 0.0
    %111 = vmatpush1.msra.mxu0 0.0
    %112 = vmatprep.subr.mxu0 0.0
    %113 = vmatpush1.msra.mxu0 0.0
    %114 = vmatprep.subr.mxu0 0.0
    %115 = vmatpush1.msra.mxu0 0.0
    %116 = vmatprep.subr.mxu0 0.0
    %117 = vmatpush1.msra.mxu0 0.0
    %118 = vmatprep.subr.mxu0 0.0
    %119 = vmatpush1.msra.mxu0 0.0
    %120 = vmatprep.subr.mxu0 0.0
    %121 = vmatpush1.msra.mxu0 0.0
    %122 = vmatprep.subr.mxu0 0.0
    %123 = vmatpush1.msra.mxu0 0.0
    %124 = vmatprep.subr.mxu0 0.0
    %125 = vmatpush1.msra.mxu0 0.0
    %126 = vmatprep.subr.mxu0 0.0
    %127 = vmatpush1.msra.mxu0 0.0
    %128 = vmatprep.subr.mxu0 0.0
    %129 = vmatpush1.msra.mxu0 0.0
    %130 = vmatprep.mubr.f32.mxu0 0.0
    %131 = vmatmul.mubr.f32.gmra.mrb[0].mxu0 %v64
    %v132 = vpop.f32.mrb[0].mxu0
    %v133 = vadd.f32 %v55, %v132
    %v134 = vpop.f32.mrb[0].mxu0
    %v135 = vadd.f32 %v59, %v134
    %136 = vdwg.mxu0
    %vm137 = vcmp.gt.f32.partialorder %v133, 0.0
    %vm138 = vcmp.gt.f32.partialorder %v135, 0.0
    %v139 = vmul.f32 %v133, 0.01
    %v140 = vmul.f32 %v135, 0.01
    %v141 = vsel %vm137, %v133, %v139
    %v142 = vsel %vm138, %v135, %v140
    %v143 = vld [vmem:[%s3] sm:$0xff]
    %v144 = vld [vmem:[%s3 + $0x8] sm:$0xff]
    %v145 = vld [vmem:[%s3 + $0x10] sm:$0xff]
    %v146 = vld [vmem:[%s3 + $0x18] sm:$0xff]
    %v147 = vld [vmem:[%s3 + $0x20] sm:$0xff]
    %v148 = vld [vmem:[%s3 + $0x28] sm:$0xff]
    %v149 = vld [vmem:[%s3 + $0x30] sm:$0xff]
    %v150 = vld [vmem:[%s3 + $0x38] sm:$0xff]
    %v151 = vld [vmem:[%s3 + $0x40] sm:$0xff]
    %v152 = vld [vmem:[%s3 + $0x48] sm:$0xff]
    %v153 = vld [vmem:[%s3 + $0x50] sm:$0xff]
    %v154 = vld [vmem:[%s3 + $0x58] sm:$0xff]
    %v155 = vld [vmem:[%s3 + $0x60] sm:$0xff]
    %v156 = vld [vmem:[%s3 + $0x68] sm:$0xff]
    %v157 = vld [vmem:[%s3 + $0x70] sm:$0xff]
    %v158 = vld [vmem:[%s3 + $0x78] sm:$0xff]
    %v159 = vld [vmem:[%s3 + $0x80] sm:$0xff]
    %v160 = vld [vmem:[%s3 + $0x88] sm:$0xff]
    %v161 = vld [vmem:[%s3 + $0x90] sm:$0xff]
    %v162 = vld [vmem:[%s3 + $0x98] sm:$0xff]
    %v163 = vld [vmem:[%s3 + $0xa0] sm:$0xff]
    %v164 = vld [vmem:[%s3 + $0xa8] sm:$0xff]
    %v165 = vld [vmem:[%s3 + $0xb0] sm:$0xff]
    %v166 = vld [vmem:[%s3 + $0xb8] sm:$0xff]
    %v167 = vld [vmem:[%s3 + $0xc0] sm:$0xff]
    %v168 = vld [vmem:[%s3 + $0xc8] sm:$0xff]
    %v169 = vld [vmem:[%s3 + $0xd0] sm:$0xff]
    %v170 = vld [vmem:[%s3 + $0xd8] sm:$0xff]
    %v171 = vld [vmem:[%s3 + $0xe0] sm:$0xff]
    %v172 = vld [vmem:[%s3 + $0xe8] sm:$0xff]
    %v173 = vld [vmem:[%s3 + $0xf0] sm:$0xff]
    %v174 = vld [vmem:[%s3 + $0xf8] sm:$0xff]
    %v175 = vld [vmem:[%s4] sm:$0x1]
    %v177 = vlaneseq
    %v178 = vshrl.u32 %v177, 7
    %v179 = vsub.s32 0, %v178
    %v180 = vrot.slane %v175, %v179
    %182 = vmatprep.subr.mxu0 0.0
    %183 = vmatpush1.msra.mxu0 %v143
    %184 = vmatprep.subr.mxu0 0.0
    %185 = vmatpush1.msra.mxu0 %v144
    %186 = vmatprep.subr.mxu0 0.0
    %187 = vmatpush1.msra.mxu0 %v145
    %188 = vmatprep.subr.mxu0 0.0
    %189 = vmatpush1.msra.mxu0 %v146
    %190 = vmatprep.subr.mxu0 0.0
    %191 = vmatpush1.msra.mxu0 %v147
    %192 = vmatprep.subr.mxu0 0.0
    %193 = vmatpush1.msra.mxu0 %v148
    %194 = vmatprep.subr.mxu0 0.0
    %195 = vmatpush1.msra.mxu0 %v149
    %196 = vmatprep.subr.mxu0 0.0
    %197 = vmatpush1.msra.mxu0 %v150
    %198 = vmatprep.subr.mxu0 0.0
    %199 = vmatpush1.msra.mxu0 %v151
    %200 = vmatprep.subr.mxu0 0.0
    %201 = vmatpush1.msra.mxu0 %v152
    %202 = vmatprep.subr.mxu0 0.0
    %203 = vmatpush1.msra.mxu0 %v153
    %204 = vmatprep.subr.mxu0 0.0
    %205 = vmatpush1.msra.mxu0 %v154
    %206 = vmatprep.subr.mxu0 0.0
    %207 = vmatpush1.msra.mxu0 %v155
    %208 = vmatprep.subr.mxu0 0.0
    %209 = vmatpush1.msra.mxu0 %v156
    %210 = vmatprep.subr.mxu0 0.0
    %211 = vmatpush1.msra.mxu0 %v157
    %212 = vmatprep.subr.mxu0 0.0
    %213 = vmatpush1.msra.mxu0 %v158
    %214 = vmatprep.subr.mxu0 0.0
    %215 = vmatpush1.msra.mxu0 %v159
    %216 = vmatprep.subr.mxu0 0.0
    %217 = vmatpush1.msra.mxu0 %v160
    %218 = vmatprep.subr.mxu0 0.0
    %219 = vmatpush1.msra.mxu0 %v161
    %220 = vmatprep.subr.mxu0 0.0
    %221 = vmatpush1.msra.mxu0 %v162
    %222 = vmatprep.subr.mxu0 0.0
    %223 = vmatpush1.msra.mxu0 %v163
    %224 = vmatprep.subr.mxu0 0.0
    %225 = vmatpush1.msra.mxu0 %v164
    %226 = vmatprep.subr.mxu0 0.0
    %227 = vmatpush1.msra.mxu0 %v165
    %228 = vmatprep.subr.mxu0 0.0
    %229 = vmatpush1.msra.mxu0 %v166
    %230 = vmatprep.subr.mxu0 0.0
    %231 = vmatpush1.msra.mxu0 %v167
    %232 = vmatprep.subr.mxu0 0.0
    %233 = vmatpush1.msra.mxu0 %v168
    %234 = vmatprep.subr.mxu0 0.0
    %235 = vmatpush1.msra.mxu0 %v169
    %236 = vmatprep.subr.mxu0 0.0
    %237 = vmatpush1.msra.mxu0 %v170
    %238 = vmatprep.subr.mxu0 0.0
    %239 = vmatpush1.msra.mxu0 %v171
    %240 = vmatprep.subr.mxu0 0.0
    %241 = vmatpush1.msra.mxu0 %v172
    %242 = vmatprep.subr.mxu0 0.0
    %243 = vmatpush1.msra.mxu0 %v173
    %244 = vmatprep.subr.mxu0 0.0
    %245 = vmatpush1.msra.mxu0 %v174
    %246 = vmatprep.mubr.f32.mxu0 %v142
    %247 = vmatmul.mubr.f32.gmra.mrb[0].mxu0 %v141
    %v248 = vpop.f32.mrb[0].mxu0
    %v249 = vadd.f32 %v180, %v248
    %v250 = vpop.f32.mrb[0].mxu0
    %251 = vdwg.mxu0
    %vm252 = vcmp.gt.f32.partialorder %v249, 0.0
    %v253 = vmul.f32 %v249, 0.01
    %v254 = vsel %vm252, %v249, %v253
    %v255 = vld [vmem:[%s5] sm:$0xff]
    %v256 = vld [vmem:[%s5 + $0x8] sm:$0xff]
    %v257 = vld [vmem:[%s5 + $0x10] sm:$0xff]
    %v258 = vld [vmem:[%s5 + $0x18] sm:$0xff]
    %v259 = vld [vmem:[%s5 + $0x20] sm:$0xff]
    %v260 = vld [vmem:[%s5 + $0x28] sm:$0xff]
    %v261 = vld [vmem:[%s5 + $0x30] sm:$0xff]
    %v262 = vld [vmem:[%s5 + $0x38] sm:$0xff]
    %v263 = vld [vmem:[%s5 + $0x40] sm:$0xff]
    %v264 = vld [vmem:[%s5 + $0x48] sm:$0xff]
    %v265 = vld [vmem:[%s5 + $0x50] sm:$0xff]
    %v266 = vld [vmem:[%s5 + $0x58] sm:$0xff]
    %v267 = vld [vmem:[%s5 + $0x60] sm:$0xff]
    %v268 = vld [vmem:[%s5 + $0x68] sm:$0xff]
    %v269 = vld [vmem:[%s5 + $0x70] sm:$0xff]
    %v270 = vld [vmem:[%s5 + $0x78] sm:$0xff]
    %v271 = vld [vmem:[%s6] sm:$0x1]
    %v273 = vlaneseq
    %v274 = vshrl.u32 %v273, 7
    %v275 = vsub.s32 0, %v274
    %v276 = vrot.slane %v271, %v275
    %278 = vmatprep.subr.mxu0 0.0
    %279 = vmatpush1.msra.mxu0 %v255
    %280 = vmatprep.subr.mxu0 0.0
    %281 = vmatpush1.msra.mxu0 %v256
    %282 = vmatprep.subr.mxu0 0.0
    %283 = vmatpush1.msra.mxu0 %v257
    %284 = vmatprep.subr.mxu0 0.0
    %285 = vmatpush1.msra.mxu0 %v258
    %286 = vmatprep.subr.mxu0 0.0
    %287 = vmatpush1.msra.mxu0 %v259
    %288 = vmatprep.subr.mxu0 0.0
    %289 = vmatpush1.msra.mxu0 %v260
    %290 = vmatprep.subr.mxu0 0.0
    %291 = vmatpush1.msra.mxu0 %v261
    %292 = vmatprep.subr.mxu0 0.0
    %293 = vmatpush1.msra.mxu0 %v262
    %294 = vmatprep.subr.mxu0 0.0
    %295 = vmatpush1.msra.mxu0 %v263
    %296 = vmatprep.subr.mxu0 0.0
    %297 = vmatpush1.msra.mxu0 %v264
    %298 = vmatprep.subr.mxu0 0.0
    %299 = vmatpush1.msra.mxu0 %v265
    %300 = vmatprep.subr.mxu0 0.0
    %301 = vmatpush1.msra.mxu0 %v266
    %302 = vmatprep.subr.mxu0 0.0
    %303 = vmatpush1.msra.mxu0 %v267
    %304 = vmatprep.subr.mxu0 0.0
    %305 = vmatpush1.msra.mxu0 %v268
    %306 = vmatprep.subr.mxu0 0.0
    %307 = vmatpush1.msra.mxu0 %v269
    %308 = vmatprep.subr.mxu0 0.0
    %309 = vmatpush1.msra.mxu0 %v270
    %310 = vmatprep.subr.mxu0 0.0
    %311 = vmatpush1.msra.mxu0 0.0
    %312 = vmatprep.subr.mxu0 0.0
    %313 = vmatpush1.msra.mxu0 0.0
    %314 = vmatprep.subr.mxu0 0.0
    %315 = vmatpush1.msra.mxu0 0.0
    %316 = vmatprep.subr.mxu0 0.0
    %317 = vmatpush1.msra.mxu0 0.0
    %318 = vmatprep.subr.mxu0 0.0
    %319 = vmatpush1.msra.mxu0 0.0
    %320 = vmatprep.subr.mxu0 0.0
    %321 = vmatpush1.msra.mxu0 0.0
    %322 = vmatprep.subr.mxu0 0.0
    %323 = vmatpush1.msra.mxu0 0.0
    %324 = vmatprep.subr.mxu0 0.0
    %325 = vmatpush1.msra.mxu0 0.0
    %326 = vmatprep.subr.mxu0 0.0
    %327 = vmatpush1.msra.mxu0 0.0
    %328 = vmatprep.subr.mxu0 0.0
    %329 = vmatpush1.msra.mxu0 0.0
    %330 = vmatprep.subr.mxu0 0.0
    %331 = vmatpush1.msra.mxu0 0.0
    %332 = vmatprep.subr.mxu0 0.0
    %333 = vmatpush1.msra.mxu0 0.0
    %334 = vmatprep.subr.mxu0 0.0
    %335 = vmatpush1.msra.mxu0 0.0
    %336 = vmatprep.subr.mxu0 0.0
    %337 = vmatpush1.msra.mxu0 0.0
    %338 = vmatprep.subr.mxu0 0.0
    %339 = vmatpush1.msra.mxu0 0.0
    %340 = vmatprep.subr.mxu0 0.0
    %341 = vmatpush1.msra.mxu0 0.0
    %342 = vmatprep.mubr.f32.mxu0 0.0
    %343 = vmatmul.mubr.f32.gmra.mrb[0].mxu0 %v254
    %v344 = vpop.f32.mrb[0].mxu0
    %v345 = vadd.f32 %v276, %v344
    %v346 = vpop.f32.mrb[0].mxu0
    %347 = vdwg.mxu0
    %vm348 = vcmp.gt.f32.partialorder %v345, 0.0
    %v349 = vmul.f32 %v345, 0.01
    %v350 = vsel %vm348, %v345, %v349
    %v351 = vld [vmem:[%s7] sm:$0xff]
    %v352 = vld [vmem:[%s7 + $0x8] sm:$0xff]
    %v353 = vld [vmem:[%s7 + $0x10] sm:$0xff]
    %v354 = vld [vmem:[%s7 + $0x18] sm:$0xff]
    %v355 = vld [vmem:[%s7 + $0x20] sm:$0xff]
    %v356 = vld [vmem:[%s7 + $0x28] sm:$0xff]
    %v357 = vld [vmem:[%s7 + $0x30] sm:$0xff]
    %v358 = vld [vmem:[%s7 + $0x38] sm:$0xff]
    %v359 = vld [vmem:[%s8] sm:$0x1]
    %v361 = vlaneseq
    %v362 = vshrl.u32 %v361, 7
    %v363 = vsub.s32 0, %v362
    %v364 = vrot.slane %v359, %v363
    %v367 = vsel %vm62, %v350, 0
    %369 = vmatprep.subr.mxu0 0.0
    %370 = vmatpush1.msra.mxu0 %v351
    %371 = vmatprep.subr.mxu0 0.0
    %372 = vmatpush1.msra.mxu0 %v352
    %373 = vmatprep.subr.mxu0 0.0
    %374 = vmatpush1.msra.mxu0 %v353
    %375 = vmatprep.subr.mxu0 0.0
    %376 = vmatpush1.msra.mxu0 %v354
    %377 = vmatprep.subr.mxu0 0.0
    %378 = vmatpush1.msra.mxu0 %v355
    %379 = vmatprep.subr.mxu0 0.0
    %380 = vmatpush1.msra.mxu0 %v356
    %381 = vmatprep.subr.mxu0 0.0
    %382 = vmatpush1.msra.mxu0 %v357
    %383 = vmatprep.subr.mxu0 0.0
    %384 = vmatpush1.msra.mxu0 %v358
    %385 = vmatprep.subr.mxu0 0.0
    %386 = vmatpush1.msra.mxu0 0.0
    %387 = vmatprep.subr.mxu0 0.0
    %388 = vmatpush1.msra.mxu0 0.0
    %389 = vmatprep.subr.mxu0 0.0
    %390 = vmatpush1.msra.mxu0 0.0
    %391 = vmatprep.subr.mxu0 0.0
    %392 = vmatpush1.msra.mxu0 0.0
    %393 = vmatprep.subr.mxu0 0.0
    %394 = vmatpush1.msra.mxu0 0.0
    %395 = vmatprep.subr.mxu0 0.0
    %396 = vmatpush1.msra.mxu0 0.0
    %397 = vmatprep.subr.mxu0 0.0
    %398 = vmatpush1.msra.mxu0 0.0
    %399 = vmatprep.subr.mxu0 0.0
    %400 = vmatpush1.msra.mxu0 0.0
    %401 = vmatprep.subr.mxu0 0.0
    %402 = vmatpush1.msra.mxu0 0.0
    %403 = vmatprep.subr.mxu0 0.0
    %404 = vmatpush1.msra.mxu0 0.0
    %405 = vmatprep.subr.mxu0 0.0
    %406 = vmatpush1.msra.mxu0 0.0
    %407 = vmatprep.subr.mxu0 0.0
    %408 = vmatpush1.msra.mxu0 0.0
    %409 = vmatprep.subr.mxu0 0.0
    %410 = vmatpush1.msra.mxu0 0.0
    %411 = vmatprep.subr.mxu0 0.0
    %412 = vmatpush1.msra.mxu0 0.0
    %413 = vmatprep.subr.mxu0 0.0
    %414 = vmatpush1.msra.mxu0 0.0
    %415 = vmatprep.subr.mxu0 0.0
    %416 = vmatpush1.msra.mxu0 0.0
    %417 = vmatprep.subr.mxu0 0.0
    %418 = vmatpush1.msra.mxu0 0.0
    %419 = vmatprep.subr.mxu0 0.0
    %420 = vmatpush1.msra.mxu0 0.0
    %421 = vmatprep.subr.mxu0 0.0
    %422 = vmatpush1.msra.mxu0 0.0
    %423 = vmatprep.subr.mxu0 0.0
    %424 = vmatpush1.msra.mxu0 0.0
    %425 = vmatprep.subr.mxu0 0.0
    %426 = vmatpush1.msra.mxu0 0.0
    %427 = vmatprep.subr.mxu0 0.0
    %428 = vmatpush1.msra.mxu0 0.0
    %429 = vmatprep.subr.mxu0 0.0
    %430 = vmatpush1.msra.mxu0 0.0
    %431 = vmatprep.subr.mxu0 0.0
    %432 = vmatpush1.msra.mxu0 0.0
    %433 = vmatprep.mubr.f32.mxu0 0.0
    %434 = vmatmul.mubr.f32.gmra.mrb[0].mxu0 %v367
    %v435 = vpop.f32.mrb[0].mxu0
    %v436 = vadd.f32 %v364, %v435
    %v437 = vpop.f32.mrb[0].mxu0
    %438 = vdwg.mxu0
    %vm439 = vcmp.gt.f32.partialorder %v436, 0.0
    %v440 = vmul.f32 %v436, 0.01
    %v441 = vsel %vm439, %v436, %v440
    %442 = vst [vmem:[#allocation2] sm:$0xff] %v441
    // Predicated region
    $region38: #{nn_demand_forward.1} parent=1 // pred_check
      _
    $region39: #{nn_demand_forward.1} parent=1 // pred_check_branch
      %444 = sbr.rel (0) target = $region41
    $region40: #{nn_demand_forward.1} parent=1 // pred_region
      %s446 = ssub.s32 128, 128
      %447 = vsyncadd [#allocation3], %s446
      %s449 = sshll.u32 [#allocation2], 4
      %s450 = int_to_ptr.vmem [resolvable:$true] %s449
      %452 = dma.vmem_to_hbm [thread:$0]  %s450, 128, %s9, [#allocation3]
    $region41: #{nn_demand_forward.1} parent=1 // pred_fallthru
      _
    // Predicated region
    $region42: #{nn_demand_forward.1} parent=1 // pred_check
      _
    $region43: #{nn_demand_forward.1} parent=1 // pred_check_branch
      %454 = sbr.rel (0) target = $region45
    $region44: #{nn_demand_forward.1} parent=1 // pred_region
      %455 = dma.done [#allocation3], 128
    $region45: #{nn_demand_forward.1} parent=1 // pred_fallthru
      _
    %456 = vsyncpa [#allocation3], 1

</llo_original>
